<compile_context>
chip_gen: v5e
topology: v5e:2x2
jax: 0.10.0
libtpu: 0.0.40
codegen_flags: <defaults>
</compile_context>

<pallas_src>
import functools
import math

import numpy as np
import jax
import jax.numpy as jnp
from jax import lax
from jax.experimental import pallas as pl
from jax.experimental.pallas import tpu as pltpu


def _round_up(x, m):
    return ((x + m - 1) // m) * m


# ----------------------------------------------------------------------------
# Gaudi mask generation (GaudiGBLR.get_width + get_mask, eval mode,
# custom_grad=False, no_gaussian=False, no_ste=False).  This is tiny
# (num_components x n) and stays in plain JAX glue (hoisted out of the kernel).
# Note: jnp.fft.irfft(..., norm='forward') matches torch.fft.irfft norm='forward'
# (the 1/n scaling lives in the forward transform for both frameworks).
# ----------------------------------------------------------------------------
def gaudi_mask(widths_row, locs_row, n, sigma, training=False):
    n_f = float(n)
    # get_width(): STE quantization -> forward value is round(w * n) / n
    w = jnp.round(widths_row.astype(jnp.float32) * n_f) / n_f
    if not training:
        # F.hardshrink(w, 1/n): keep only |w| > 1/n
        w = jnp.where(jnp.abs(w) > 1.0 / n_f, w, 0.0)
    # location STE quantization -> forward value is round(loc * n) / n
    loc = jnp.round(locs_row.astype(jnp.float32) * n_f) / n_f

    w_ = w[:, None]                                     # (nc, 1)
    loc_ = loc[:, None] * 2.0 * jnp.pi                  # (nc, 1)
    freq = jnp.arange(0.0, n // 2 + 1, 1.0)[None, :]    # (1, n//2+1)

    exponent_imag = -freq * loc_ + jnp.pi * freq * (1.0 / n_f - w_)
    exponent_real = -0.5 / (sigma ** 2) * freq ** 2      # Gaussian smoothing term
    amp = w_ * jnp.sinc(freq * w_) / jnp.sinc(freq / n_f)
    spec = amp * jnp.exp(exponent_real) * (jnp.cos(exponent_imag)
                                           + 1j * jnp.sin(exponent_imag))
    mask = jnp.fft.irfft(spec, n=n, norm='forward')      # (nc, n)
    if not training:
        mask = jnp.where(jnp.abs(mask) < 0.001, 0.0, mask)
    return mask.astype(jnp.float32)


# ----------------------------------------------------------------------------
# Pallas kernel: one row-tile of the two-stage low-rank linear layer.
#   x_ref   : (TM, in_f_p)     activation tile
#   w1t_ref : (in_f_p, R_p)    masked W1, transposed (contraction-major, resident)
#   w2t_ref : (R_p, out_f_p)   masked W2, transposed (contraction-major, resident)
#   b_ref   : (1, out_f_p)     bias (f32)
#   o_ref   : (TM, out_f_p)    output tile
# ----------------------------------------------------------------------------
def _gblr_lowrank_kernel(x_ref, w1t_ref, w2t_ref, b_ref, o_ref):
    t = jnp.dot(x_ref[...], w1t_ref[...], preferred_element_type=jnp.float32)
    y = jnp.dot(t.astype(w2t_ref.dtype), w2t_ref[...],
                preferred_element_type=jnp.float32)
    o_ref[...] = (y + b_ref[...]).astype(o_ref.dtype)


def gaudi_gblr_forward(x, params, *, sigma=100.0, training=False, block_m=512):
    lr1 = params['lr_weight1']                       # (nc, rpc, in_f)
    lr2 = params['lr_weight2']                       # (nc, out_f, rpc)
    widths = params['widths']                        # (2, nc)
    locations = params['locations']                  # (2, nc)
    bias = params['bias']                            # (out_f,)

    nc, rpc, in_f = lr1.shape
    out_f = lr2.shape[1]
    R = nc * rpc

    compute_dtype = x.dtype                          # torch F.linear preserves input dtype

    B, N, C = x.shape
    if C < in_f:                                     # F.pad(input, (0, in_f - C))
        x = jnp.pad(x, ((0, 0), (0, 0), (0, in_f - C)))
    x2d = x.reshape(B * N, in_f)
    M = B * N

    # --- masks + stacked masked low-rank factors (tiny; plain XLA, hoisted) ----
    m1 = gaudi_mask(widths[0], locations[0], in_f, sigma, training)    # (nc, in_f)
    m2 = gaudi_mask(widths[1], locations[1], out_f, sigma, training)   # (nc, out_f)

    w1s = (lr1.astype(jnp.float32) * m1[:, None, :]).reshape(R, in_f)  # (R, in_f)
    # W2 stacked as (R, out_f):  element [c*rpc + r, o] = (lr2 * m2)[c, o, r]
    w2t = jnp.transpose(lr2.astype(jnp.float32) * m2[:, :, None],
                        (0, 2, 1)).reshape(R, out_f)                    # (R, out_f)
    w1t = w1s.T                                                         # (in_f, R)

    # --- pad to TPU-friendly shapes (zero padding -> math unchanged) ----------
    sub = 8 * (4 // jnp.dtype(compute_dtype).itemsize)   # 8 for f32, 16 for bf16
    in_f_p = _round_up(in_f, 128)
    out_f_p = _round_up(out_f, 128)
    R_p = _round_up(R, sub)
    tm = _round_up(min(block_m, _round_up(M, 8)), 8)
    M_p = _round_up(M, tm)

    x2d = jnp.pad(x2d, ((0, M_p - M), (0, in_f_p - in_f))).astype(compute_dtype)
    w1t = jnp.pad(w1t, ((0, in_f_p - in_f), (0, R_p - R))).astype(compute_dtype)
    w2t = jnp.pad(w2t, ((0, R_p - R), (0, out_f_p - out_f))).astype(compute_dtype)
    b2d = jnp.pad(bias.astype(jnp.float32), (0, out_f_p - out_f)).reshape(1, out_f_p)

    grid = (M_p // tm,)
    out2d = pl.pallas_call(
        _gblr_lowrank_kernel,
        out_shape=jax.ShapeDtypeStruct((M_p, out_f_p), compute_dtype),
        grid_spec=pltpu.PrefetchScalarGridSpec(
            num_scalar_prefetch=0,
            grid=grid,
            in_specs=[
                pl.BlockSpec((tm, in_f_p), lambda i: (i, 0)),      # x row-tile
                pl.BlockSpec((in_f_p, R_p), lambda i: (0, 0)),     # W1t (resident)
                pl.BlockSpec((R_p, out_f_p), lambda i: (0, 0)),    # W2t (resident)
                pl.BlockSpec((1, out_f_p), lambda i: (0, 0)),      # bias
            ],
            out_specs=pl.BlockSpec((tm, out_f_p), lambda i: (i, 0)),
        ),
        compiler_params=pltpu.CompilerParams(
            dimension_semantics=("parallel",)),
    )(x2d, w1t, w2t, b2d)

    return out2d[:M, :out_f].reshape(B, N, out_f)


# ----------------------------------------------------------------------------
# Deterministic parameter init (mirrors GaudiGBLR.__init__ / set_weights /
# reset_parameters; widths/locations uniform(0,1) for a nontrivial mask).
# ----------------------------------------------------------------------------
def init_params(key, in_features, out_features, rank_per_component, num_components):
    nc, rpc = num_components, rank_per_component
    k1, k2, k3, k4, k5 = jax.random.split(key, 5)
    b1 = 1.0 / math.sqrt(in_features)                 # kaiming-uniform bound, fan_in=in
    lr1 = jax.random.uniform(k1, (nc, rpc, in_features), jnp.float32, -b1, b1)
    b2 = 1.0 / math.sqrt(rpc)                         # fan_in = rank_per_component
    lr2 = jax.random.uniform(k2, (nc, out_features, rpc), jnp.float32, -b2, b2)
    bb = 1.0 / math.sqrt(rpc * in_features)           # fan_in of lr_weight1
    bias = jax.random.uniform(k3, (out_features,), jnp.float32, -bb, bb)
    widths = jax.random.uniform(k4, (2, nc), jnp.float32, 0.0, 1.0)
    locations = jax.random.uniform(k5, (2, nc), jnp.float32, 0.0, 1.0)
    return dict(lr_weight1=lr1, lr_weight2=lr2, bias=bias,
                widths=widths, locations=locations)


# ----------------------------------------------------------------------------
# Pure numpy reference of the dense forward path (uses the same mask glue).
# ----------------------------------------------------------------------------
def reference_forward(x, params, sigma=100.0, training=False):
    lr1 = np.asarray(params['lr_weight1'], np.float64)
    lr2 = np.asarray(params['lr_weight2'], np.float64)
    bias = np.asarray(params['bias'], np.float64)
    nc, rpc, in_f = lr1.shape
    out_f = lr2.shape[1]

    B, N, C = x.shape
    xn = np.asarray(x, np.float64)
    if C < in_f:
        xn = np.pad(xn, ((0, 0), (0, 0), (0, in_f - C)))
    x2d = xn.reshape(B * N, in_f)

    m1 = np.asarray(gaudi_mask(params['widths'][0], params['locations'][0],
                               in_f, sigma, training), np.float64)
    m2 = np.asarray(gaudi_mask(params['widths'][1], params['locations'][1],
                               out_f, sigma, training), np.float64)

    w1 = (lr1 * m1[:, None, :]).reshape(nc * rpc, in_f)          # (nc*rpc, in)
    w2 = np.transpose(lr2 * m2[:, :, None], (1, 0, 2)).reshape(out_f, nc * rpc)
    masked_w = w2 @ w1                                           # (out, in)
    y = x2d @ masked_w.T + bias[None, :]
    return y.reshape(B, N, out_f)


if __name__ == "__main__":
    key = jax.random.PRNGKey(0)

    # ---- Test 1: small shapes, input narrower than in_features (exercises C-pad),
    #              in_features != out_features (guards against transposition bugs).
    B, N, C = 2, 8, 24
    in_features, out_features = 32, 48
    rank_per_component, num_components = 4, 4
    kx, kp, kx2, kp2 = jax.random.split(key, 4)
    params = init_params(kp, in_features, out_features,
                         rank_per_component, num_components)
    x = jax.random.normal(kx, (B, N, C), jnp.float32)

    out = jax.block_until_ready(gaudi_gblr_forward(x, params))
    ref = reference_forward(x, params)
    assert out.shape == (B, N, out_features)
    np.testing.assert_allclose(np.asarray(out), ref, rtol=1e-3, atol=1e-3)

    # ---- Test 2: multiple row tiles (block_m smaller than M) to exercise the grid
    #              pipeline and the M padding/crop path.
    B2, N2 = 4, 40
    in2, out2 = 32, 32
    params2 = init_params(kp2, in2, out2, rank_per_component, num_components)
    x2 = jax.random.normal(kx2, (B2, N2, in2), jnp.float32)
    out_t = jax.block_until_ready(
        gaudi_gblr_forward(x2, params2, block_m=64))
    ref_t = reference_forward(x2, params2)
    assert out_t.shape == (B2, N2, out2)
    np.testing.assert_allclose(np.asarray(out_t), ref_t, rtol=1e-3, atol=1e-3)

    # ---- Test 3: bf16 smoke run (bf16 MXU feed, f32 accumulation, bf16 output).
    out_bf16 = jax.block_until_ready(
        gaudi_gblr_forward(x.astype(jnp.bfloat16), params))
    assert out_bf16.shape == (B, N, out_features)
    assert out_bf16.dtype == jnp.bfloat16
    assert bool(jnp.all(jnp.isfinite(out_bf16.astype(jnp.float32))))

    print("KERNEL_OK")
</pallas_src>

<mosaic_0001>
module attributes {stable_mosaic.version = 11 : i64} {
  func.func @_gblr_lowrank_kernel(%arg0: i32, %arg1: memref<16x128xf32, #tpu.memory_space<vmem>>, %arg2: memref<128x16xf32, #tpu.memory_space<vmem>>, %arg3: memref<16x128xf32, #tpu.memory_space<vmem>>, %arg4: memref<1x128xf32, #tpu.memory_space<vmem>>, %arg5: memref<16x128xf32, #tpu.memory_space<vmem>>) attributes {dimension_semantics = [#tpu.dimension_semantics<parallel>], iteration_bounds = array<i64: 1>, scalar_prefetch = 0 : i64, scratch_operands = 0 : i64, tpu.core_type = #tpu.core_type<tc>, window_params = [{transform_indices = @transform_0, window_bounds = array<i64: 16, 128>}, {pipeline_mode = #tpu.pipeline_mode<synchronous>, transform_indices = @transform_1, window_bounds = array<i64: 128, 16>}, {pipeline_mode = #tpu.pipeline_mode<synchronous>, transform_indices = @transform_2, window_bounds = array<i64: 16, 128>}, {pipeline_mode = #tpu.pipeline_mode<synchronous>, transform_indices = @transform_3, window_bounds = array<i64: 1, 128>}, {transform_indices = @transform_4, window_bounds = array<i64: 16, 128>}]} {
    %c0 = arith.constant 0 : index
    %c0_0 = arith.constant 0 : index
    %0 = vector.load %arg1[%c0, %c0_0] : memref<16x128xf32, #tpu.memory_space<vmem>>, vector<16x128xf32>
    %c0_1 = arith.constant 0 : index
    %c0_2 = arith.constant 0 : index
    %1 = vector.load %arg2[%c0_1, %c0_2] : memref<128x16xf32, #tpu.memory_space<vmem>>, vector<128x16xf32>
    %cst = arith.constant dense<0.000000e+00> : vector<16x16xf32>
    %2 = tpu.matmul %0, %1, %cst {dimension_numbers = #tpu.dot_dimension_numbers<[1], [0], [0], [1], [0, 0, 1, 1], [], []>} : vector<16x128xf32>, vector<128x16xf32>, vector<16x16xf32> -> vector<16x16xf32>
    %c0_3 = arith.constant 0 : index
    %c0_4 = arith.constant 0 : index
    %3 = vector.load %arg3[%c0_3, %c0_4] : memref<16x128xf32, #tpu.memory_space<vmem>>, vector<16x128xf32>
    %cst_5 = arith.constant dense<0.000000e+00> : vector<16x128xf32>
    %4 = tpu.matmul %2, %3, %cst_5 {dimension_numbers = #tpu.dot_dimension_numbers<[1], [0], [0], [1], [0, 0, 1, 1], [], []>} : vector<16x16xf32>, vector<16x128xf32>, vector<16x128xf32> -> vector<16x128xf32>
    %c0_6 = arith.constant 0 : index
    %c0_7 = arith.constant 0 : index
    %5 = vector.load %arg4[%c0_6, %c0_7] : memref<1x128xf32, #tpu.memory_space<vmem>>, vector<1x128xf32>
    %6 = vector.broadcast %5 : vector<1x128xf32> to vector<16x128xf32>
    %7 = arith.addf %4, %6 : vector<16x128xf32>
    %c0_8 = arith.constant 0 : index
    %c0_9 = arith.constant 0 : index
    %8 = vector.load %arg5[%c0_8, %c0_9] : memref<16x128xf32, #tpu.memory_space<vmem>>, vector<16x128xf32>
    tpu.vector_store %arg5[%c0_8, %c0_9], %7 {strides = array<i32>} : memref<16x128xf32, #tpu.memory_space<vmem>>, vector<16x128xf32>,
    return
  }
  func.func @transform_0(%arg0: i32) -> (i32, i32) {
    %c0_i32 = arith.constant 0 : i32
    %c0_i32_0 = arith.constant 0 : i32
    return %arg0, %c0_i32 : i32, i32
  }
  func.func @transform_1(%arg0: i32) -> (i32, i32) {
    %c0_i32 = arith.constant 0 : i32
    %c0_i32_0 = arith.constant 0 : i32
    %c0_i32_1 = arith.constant 0 : i32
    return %c0_i32, %c0_i32_0 : i32, i32
  }
  func.func @transform_2(%arg0: i32) -> (i32, i32) {
    %c0_i32 = arith.constant 0 : i32
    %c0_i32_0 = arith.constant 0 : i32
    %c0_i32_1 = arith.constant 0 : i32
    return %c0_i32, %c0_i32_0 : i32, i32
  }
  func.func @transform_3(%arg0: i32) -> (i32, i32) {
    %c0_i32 = arith.constant 0 : i32
    %c0_i32_0 = arith.constant 0 : i32
    %c0_i32_1 = arith.constant 0 : i32
    return %c0_i32, %c0_i32_0 : i32, i32
  }
  func.func @transform_4(%arg0: i32) -> (i32, i32) {
    %c0_i32 = arith.constant 0 : i32
    %c0_i32_0 = arith.constant 0 : i32
    return %arg0, %c0_i32 : i32, i32
  }
}

</mosaic_0001>

<llo_original>
// kernel: tpu_custom_call.1
$region0: #{tpu_custom_call.1}
  #allocation0 [shape = 'u32[]', space=smem, size = 0x4, offset = 0x4, fixed_abs, tag = 'smem constant byte address 0x4 - core index']
  #allocation1 [shape = 'u32[72,128]{1,0:T(1,128)}', space=vmem, size = 0x9000, scoped, tag = 'internal scratch']
  %s0 = inlined_call_operand.vmem [shape: f32[16,128], index: 0, kind: input, shape index: {}]
  %s1 = inlined_call_operand.vmem [shape: f32[128,16], index: 1, kind: input, shape index: {}]
  %s2 = inlined_call_operand.vmem [shape: f32[16,128], index: 2, kind: input, shape index: {}]
  %s3 = inlined_call_operand.vmem [shape: f32[1,128], index: 3, kind: input, shape index: {}]
  %s4 = inlined_call_operand.hbm [shape: f32[16,128], index: 4, kind: output, shape index: {}]
  %s5 = sld [smem:[#allocation0]]
  $region26: #{tpu_custom_call.1} parent=0
    _
  %s7 = ssub.s32 1, %s5
  %s8 = scalar_select 0, %s7, %s5
  $region1: #{tpu_custom_call.1} parent=0
    #allocation2 [shape = 'u8[8192]{0}', space=vmem, size = 0x2000, scoped, tag = 'output window, operand 0, single buffered']
    #allocation3 [shape = 's32[1]{0}', space=sflag, size = 0x4, scoped, tag = 'scoped memory for tpu_custom_call.1']
    %9 = vsyncpa [#allocation3], 0
    // Predicated region
    $region2: #{tpu_custom_call.1} parent=1 // pred_check
      _
    $region3: #{tpu_custom_call.1} parent=1 // pred_check_branch
      %11 = sbr.rel (0) target = $region5
    $region4: #{tpu_custom_call.1} parent=1 // pred_region
      _
    $region5: #{tpu_custom_call.1} parent=1 // pred_fallthru
      _
    // Predicated region
    $region6: #{tpu_custom_call.1} parent=1 // pred_check
      _
    $region7: #{tpu_custom_call.1} parent=1 // pred_check_branch
      %13 = sbr.rel (0) target = $region9
    $region8: #{tpu_custom_call.1} parent=1 // pred_region
      _
    $region9: #{tpu_custom_call.1} parent=1 // pred_fallthru
      _
    // Predicated region
    $region10: #{tpu_custom_call.1} parent=1 // pred_check
      _
    $region11: #{tpu_custom_call.1} parent=1 // pred_check_branch
      %15 = sbr.rel (0) target = $region13
    $region12: #{tpu_custom_call.1} parent=1 // pred_region
      _
    $region13: #{tpu_custom_call.1} parent=1 // pred_fallthru
      _
    // Predicated region
    $region14: #{tpu_custom_call.1} parent=1 // pred_check
      _
    $region15: #{tpu_custom_call.1} parent=1 // pred_check_branch
      %17 = sbr.rel (0) target = $region17
    $region16: #{tpu_custom_call.1} parent=1 // pred_region
      _
    $region17: #{tpu_custom_call.1} parent=1 // pred_fallthru
      _
    %v18 = vld [vmem:[%s0] sm:$0xff]
    %v19 = vld [vmem:[%s0 + $0x8] sm:$0xff]
    %v20 = vld [vmem:[%s1] sm:$0xff]
    %v21 = vld [vmem:[%s1 + $0x8] sm:$0xff]
    %v22 = vld [vmem:[%s1 + $0x10] sm:$0xff]
    %v23 = vld [vmem:[%s1 + $0x18] sm:$0xff]
    %v24 = vld [vmem:[%s1 + $0x20] sm:$0xff]
    %v25 = vld [vmem:[%s1 + $0x28] sm:$0xff]
    %v26 = vld [vmem:[%s1 + $0x30] sm:$0xff]
    %v27 = vld [vmem:[%s1 + $0x38] sm:$0xff]
    %v28 = vld [vmem:[%s1 + $0x40] sm:$0xff]
    %v29 = vld [vmem:[%s1 + $0x48] sm:$0xff]
    %v30 = vld [vmem:[%s1 + $0x50] sm:$0xff]
    %v31 = vld [vmem:[%s1 + $0x58] sm:$0xff]
    %v32 = vld [vmem:[%s1 + $0x60] sm:$0xff]
    %v33 = vld [vmem:[%s1 + $0x68] sm:$0xff]
    %v34 = vld [vmem:[%s1 + $0x70] sm:$0xff]
    %v35 = vld [vmem:[%s1 + $0x78] sm:$0xff]
    %36 = vmatpush.msra.mxu0 %v35
    %37 = vmatpush.msra.mxu0 %v34
    %38 = vmatpush.msra.mxu0 %v33
    %39 = vmatpush.msra.mxu0 %v32
    %40 = vmatpush.msra.mxu0 %v31
    %41 = vmatpush.msra.mxu0 %v30
    %42 = vmatpush.msra.mxu0 %v29
    %43 = vmatpush.msra.mxu0 %v28
    %44 = vmatpush.msra.mxu0 %v27
    %45 = vmatpush.msra.mxu0 %v26
    %46 = vmatpush.msra.mxu0 %v25
    %47 = vmatpush.msra.mxu0 %v24
    %48 = vmatpush.msra.mxu0 %v23
    %49 = vmatpush.msra.mxu0 %v22
    %50 = vmatpush.msra.mxu0 %v21
    %51 = vmatpush.msra.mxu0 %v20
    %52 = vmatmul.f32.gmra.mxu0 %v18
    %v53 = vpop.f32.mrf.mxu0
    %v54 = vadd.f32 0.0, %v53
    %55 = vmatmul.f32.gmra.mxu0 %v19
    %v56 = vpop.f32.mrf.mxu0
    %v57 = vadd.f32 0.0, %v56
    %58 = vdwg.mxu0
    %v59 = vld [vmem:[%s2] sm:$0xff]
    %v60 = vld [vmem:[%s2 + $0x8] sm:$0xff]
    %v61 = vld [vmem:[%s3] sm:$0x1]
    %v63 = vperm.slane %v61, 0
    %vm65 = vcmask 130048
    %v67 = vsel %vm65, %v54, 0
    %v70 = vsel %vm65, %v57, 0
    %72 = vmatpush.msra.mxu0 0.0
    %73 = vmatpush.msra.mxu0 0.0
    %74 = vmatpush.msra.mxu0 0.0
    %75 = vmatpush.msra.mxu0 0.0
    %76 = vmatpush.msra.mxu0 0.0
    %77 = vmatpush.msra.mxu0 0.0
    %78 = vmatpush.msra.mxu0 0.0
    %79 = vmatpush.msra.mxu0 0.0
    %80 = vmatpush.msra.mxu0 0.0
    %81 = vmatpush.msra.mxu0 0.0
    %82 = vmatpush.msra.mxu0 0.0
    %83 = vmatpush.msra.mxu0 0.0
    %84 = vmatpush.msra.mxu0 0.0
    %85 = vmatpush.msra.mxu0 0.0
    %86 = vmatpush.msra.mxu0 %v60
    %87 = vmatpush.msra.mxu0 %v59
    %88 = vmatmul.f32.gmra.mxu0 %v67
    %v89 = vpop.f32.mrf.mxu0
    %v90 = vadd.f32 %v63, %v89
    %91 = vmatmul.f32.gmra.mxu0 %v70
    %v92 = vpop.f32.mrf.mxu0
    %v93 = vadd.f32 %v63, %v92
    %94 = vdwg.mxu0
    %95 = vst [vmem:[#allocation2] sm:$0xff] %v90
    %96 = vst [vmem:[#allocation2 + $0x8] sm:$0xff] %v93
    // Predicated region
    $region18: #{tpu_custom_call.1} parent=1 // pred_check
      _
    $region19: #{tpu_custom_call.1} parent=1 // pred_check_branch
      %98 = sbr.rel (0) target = $region21
    $region20: #{tpu_custom_call.1} parent=1 // pred_region
      %100 = vsyncadd [#allocation3], 0
      %s101 = sshll.u32 [#allocation2], 4
      %s102 = int_to_ptr.vmem [resolvable:$true] %s101
      %s103 = sshll.u32 %s4, 4
      %s104 = int_to_ptr.hbm [resolvable:$true] %s103
      %109 = dma.vmem_to_hbm [thread:$0]  %s102, 256, %s104, [#allocation3], 128, 128, 8
    $region21: #{tpu_custom_call.1} parent=1 // pred_fallthru
      _
    // Predicated region
    $region22: #{tpu_custom_call.1} parent=1 // pred_check
      _
    $region23: #{tpu_custom_call.1} parent=1 // pred_check_branch
      %111 = sbr.rel (0) target = $region25
    $region24: #{tpu_custom_call.1} parent=1 // pred_region
      %113 = dma.done [#allocation3], 256
    $region25: #{tpu_custom_call.1} parent=1 // pred_fallthru
      _
    %114 = vsyncpa [#allocation3], 1

</llo_original>
